<compile_context>
chip_gen: v6e
topology: v6e:2x2x1
jax: 0.10.0
libtpu: 0.0.40
codegen_flags: <defaults>
</compile_context>

<pallas_src>
import functools

import jax
import jax.numpy as jnp
from jax import lax
from jax.experimental import pallas as pl
from jax.experimental.pallas import tpu as pltpu


def lstm_pred_kernel(seq_ref, w_ih_ref, w_hh_ref, bias_ref, w_out_ref,
                     b_out_ref, out_ref, ih_scr, h_scr, *, hidden_dim, batch):
    """One-shot kernel: whole recurrent loop + output projection in VMEM.

    seq_ref  : (T, B, 1)   input sequence (input_size == 1 per forward())
    w_ih_ref : (1, 4H)     LSTM input weights, gate order (i,f,o,g)
    w_hh_ref : (H, 4H)     LSTM recurrent weights (pre-transposed), (i,f,o,g)
    bias_ref : (1, 4H)     b_ih + b_hh, gate order (i,f,o,g)
    w_out_ref: (1, H)      hidden2out weight
    b_out_ref: (1, 1)      hidden2out bias (SMEM scalar)
    out_ref  : (T, B)      per-timestep scalar output
    ih_scr   : (T, B, 4H)  precomputed input+bias gate contribution
    h_scr    : (T, B, H)   per-step hidden states (fed to hoisted projection)
    """
    H = hidden_dim
    B = batch
    T = seq_ref.shape[0]

    # --- Precompute x_t * W_ih^T + (b_ih + b_hh) for every timestep at once.
    # (T,B,1) * (1,1,4H) + (1,1,4H) -> (T,B,4H); off the recurrent critical path.
    ih_scr[...] = (seq_ref[...] * w_ih_ref[...].reshape(1, 1, 4 * H)
                   + bias_ref[...].reshape(1, 1, 4 * H))

    w_hh_t = w_hh_ref[...]                                    # (H, 4H), loaded once

    # --- Recurrence: h/c live in vregs; only h is spilled (for the hoisted proj).
    def step(t, carry):
        h, c = carry                                          # (B,H), (B,H)
        gates = ih_scr[t] + jnp.dot(h, w_hh_t,
                                    preferred_element_type=jnp.float32)  # (B,4H)
        sig = jax.nn.sigmoid(gates[:, 0:3 * H])               # i | f | o together
        i_g = sig[:, 0:H]
        f_g = sig[:, H:2 * H]
        o_g = sig[:, 2 * H:3 * H]
        g_g = jnp.tanh(gates[:, 3 * H:4 * H])
        c_new = f_g * c + i_g * g_g
        h_new = o_g * jnp.tanh(c_new)
        h_scr[t] = h_new
        return (h_new, c_new)

    zeros = jnp.zeros((B, H), jnp.float32)                    # init_hidden(): zeros
    lax.fori_loop(0, T, step, (zeros, zeros), unroll=True)

    # --- Hoisted hidden2out: one projection over all timesteps + one store. ---
    w_out_b = w_out_ref[...].reshape(1, 1, H)                 # (1,1,H)
    out_ref[...] = (jnp.sum(h_scr[...] * w_out_b, axis=-1)    # (T,B)
                    + b_out_ref[0, 0])


def _reorder_gates(m, hidden_dim):
    """Permute PyTorch gate-row order (i,f,g,o) -> (i,f,o,g) along axis 0."""
    H = hidden_dim
    return jnp.concatenate([m[:2 * H], m[3 * H:4 * H], m[2 * H:3 * H]], axis=0)


def lstm_pred_forward(seq, params, batchsize, hidden_dim):
    """Pallas equivalent of LSTMpred.forward(seq) with zero initial hidden."""
    w_ih, w_hh, b_ih, b_hh, w_out, b_out = params
    B = batchsize
    H = hidden_dim
    T = seq.shape[0] // B
    assert T * B == seq.shape[0], "len(seq) must be divisible by batchsize"
    # H=32 makes 4H exactly one 128-lane vreg; other H still work (lane slices
    # at H boundaries) but are less perfectly aligned.

    seq3 = seq.reshape(T, B, 1).astype(jnp.float32)
    w_ih_r = _reorder_gates(w_ih.reshape(4 * H, 1), H).reshape(1, 4 * H).astype(jnp.float32)
    bias_r = _reorder_gates((b_ih + b_hh).reshape(4 * H, 1), H).reshape(1, 4 * H).astype(jnp.float32)
    w_hh_r = _reorder_gates(w_hh, H).T.astype(jnp.float32)    # (H, 4H)
    w_out2 = w_out.reshape(1, H).astype(jnp.float32)
    b_out2 = b_out.reshape(1, 1).astype(jnp.float32)

    kernel = functools.partial(lstm_pred_kernel, hidden_dim=H, batch=B)
    out = pl.pallas_call(
        kernel,
        out_shape=jax.ShapeDtypeStruct((T, B), jnp.float32),
        in_specs=[pl.BlockSpec(memory_space=pltpu.MemorySpace.VMEM)] * 5
                 + [pl.BlockSpec(memory_space=pltpu.MemorySpace.SMEM)],
        out_specs=pl.BlockSpec(memory_space=pltpu.MemorySpace.VMEM),
        scratch_shapes=[pltpu.VMEM((T, B, 4 * H), jnp.float32),
                        pltpu.VMEM((T, B, H), jnp.float32)],
    )(seq3, w_ih_r, w_hh_r, bias_r, w_out2, b_out2)

    # matches PyTorch hidden2out(lstm_out.view(len(seq), -1)) -> (T*B, 1)
    return out.reshape(T * B, 1)


def lstm_pred_reference(seq, params, batchsize, hidden_dim):
    """Pure-JAX reference (mirrors torch.nn.LSTM + Linear semantics)."""
    w_ih, w_hh, b_ih, b_hh, w_out, b_out = params
    B, H = batchsize, hidden_dim
    T = seq.shape[0] // B
    x = seq.reshape(T, B, 1)

    def step(carry, x_t):
        h, c = carry
        gates = x_t @ w_ih.T + h @ w_hh.T + b_ih + b_hh
        i, f, g, o = jnp.split(gates, 4, axis=-1)
        i = jax.nn.sigmoid(i)
        f = jax.nn.sigmoid(f)
        g = jnp.tanh(g)
        o = jax.nn.sigmoid(o)
        c = f * c + i * g
        h = o * jnp.tanh(c)
        return (h, c), h

    init = (jnp.zeros((B, H), jnp.float32), jnp.zeros((B, H), jnp.float32))
    _, hs = lax.scan(step, init, x)
    return hs.reshape(T * B, H) @ w_out.T + b_out


if __name__ == "__main__":
    # Module config implied by forward(): input_size = 1.
    batchsize = 2
    hidden_dim = 32
    seq_len_per_batch = 8                      # T
    total_len = seq_len_per_batch * batchsize  # len(seq) = T * B

    key = jax.random.PRNGKey(0)
    k_seq, k_wih, k_whh, k_bih, k_bhh, k_wout, k_bout = jax.random.split(key, 7)

    bound = 1.0 / jnp.sqrt(hidden_dim)
    params = (
        jax.random.uniform(k_wih, (4 * hidden_dim, 1), jnp.float32, -bound, bound),
        jax.random.uniform(k_whh, (4 * hidden_dim, hidden_dim), jnp.float32, -bound, bound),
        jax.random.uniform(k_bih, (4 * hidden_dim,), jnp.float32, -bound, bound),
        jax.random.uniform(k_bhh, (4 * hidden_dim,), jnp.float32, -bound, bound),
        jax.random.uniform(k_wout, (1, hidden_dim), jnp.float32, -bound, bound),
        jax.random.uniform(k_bout, (1,), jnp.float32, -bound, bound),
    )

    seq = jax.random.normal(k_seq, (total_len,), jnp.float32)

    out = lstm_pred_forward(seq, params, batchsize, hidden_dim)
    out = jax.block_until_ready(out)

    ref = lstm_pred_reference(seq, params, batchsize, hidden_dim)
    assert out.shape == (total_len, 1), out.shape
    assert jnp.allclose(out, ref, atol=1e-4, rtol=1e-4), (
        f"max abs err {jnp.max(jnp.abs(out - ref))}")

    print("KERNEL_OK")
</pallas_src>

<mosaic_0001>
module attributes {stable_mosaic.version = 11 : i64} {
  func.func @lstm_pred_kernel(%arg0: memref<8x2x1xf32, #tpu.memory_space<vmem>>, %arg1: memref<1x128xf32, #tpu.memory_space<vmem>>, %arg2: memref<32x128xf32, #tpu.memory_space<vmem>>, %arg3: memref<1x128xf32, #tpu.memory_space<vmem>>, %arg4: memref<1x32xf32, #tpu.memory_space<vmem>>, %arg5: memref<1x1xf32, #tpu.memory_space<smem>>, %arg6: memref<8x2xf32, #tpu.memory_space<vmem>>, %arg7: memref<8x2x128xf32, #tpu.memory_space<vmem>>, %arg8: memref<8x2x32xf32, #tpu.memory_space<vmem>>) attributes {dimension_semantics = [], scalar_prefetch = 0 : i64, scratch_operands = 2 : i64, tpu.core_type = #tpu.core_type<tc>} {
    %c0 = arith.constant 0 : index
    %c0_0 = arith.constant 0 : index
    %c0_1 = arith.constant 0 : index
    %0 = vector.load %arg0[%c0, %c0_0, %c0_1] : memref<8x2x1xf32, #tpu.memory_space<vmem>>, vector<8x2x1xf32>
    %c0_2 = arith.constant 0 : index
    %c0_3 = arith.constant 0 : index
    %1 = vector.load %arg1[%c0_2, %c0_3] : memref<1x128xf32, #tpu.memory_space<vmem>>, vector<1x128xf32>
    %2 = vector.shape_cast %1 : vector<1x128xf32> to vector<1x1x128xf32>
    %3 = vector.broadcast %0 : vector<8x2x1xf32> to vector<8x2x128xf32>
    %4 = vector.broadcast %2 : vector<1x1x128xf32> to vector<8x2x128xf32>
    %5 = arith.mulf %3, %4 : vector<8x2x128xf32>
    %c0_4 = arith.constant 0 : index
    %c0_5 = arith.constant 0 : index
    %6 = vector.load %arg3[%c0_4, %c0_5] : memref<1x128xf32, #tpu.memory_space<vmem>>, vector<1x128xf32>
    %7 = vector.shape_cast %6 : vector<1x128xf32> to vector<1x1x128xf32>
    %8 = vector.broadcast %7 : vector<1x1x128xf32> to vector<8x2x128xf32>
    %9 = arith.addf %5, %8 : vector<8x2x128xf32>
    %c0_6 = arith.constant 0 : index
    %c0_7 = arith.constant 0 : index
    %c0_8 = arith.constant 0 : index
    %10 = vector.load %arg7[%c0_6, %c0_7, %c0_8] : memref<8x2x128xf32, #tpu.memory_space<vmem>>, vector<8x2x128xf32>
    tpu.vector_store %arg7[%c0_6, %c0_7, %c0_8], %9 {strides = array<i32>} : memref<8x2x128xf32, #tpu.memory_space<vmem>>, vector<8x2x128xf32>,
    %c0_9 = arith.constant 0 : index
    %c0_10 = arith.constant 0 : index
    %11 = vector.load %arg2[%c0_9, %c0_10] : memref<32x128xf32, #tpu.memory_space<vmem>>, vector<32x128xf32>
    %cst = arith.constant 0.000000e+00 : f32
    %12 = vector.broadcast %cst : f32 to vector<2x32xf32>
    %c0_i32 = arith.constant 0 : i32
    %13 = arith.index_cast %c0_i32 : i32 to index
    %c0_11 = arith.constant 0 : index
    %c0_12 = arith.constant 0 : index
    %14 = vector.load %arg7[%13, %c0_11, %c0_12] : memref<8x2x128xf32, #tpu.memory_space<vmem>>, vector<1x2x128xf32>
    %15 = vector.shape_cast %14 : vector<1x2x128xf32> to vector<2x128xf32>
    %cst_13 = arith.constant dense<0.000000e+00> : vector<2x128xf32>
    %16 = tpu.matmul %12, %11, %cst_13 {dimension_numbers = #tpu.dot_dimension_numbers<[1], [0], [0], [1], [0, 0, 1, 1], [], []>} : vector<2x32xf32>, vector<32x128xf32>, vector<2x128xf32> -> vector<2x128xf32>
    %17 = arith.addf %15, %16 : vector<2x128xf32>
    %18 = vector.extract_strided_slice %17 {offsets = [0, 0], sizes = [2, 96], strides = [1, 1]} : vector<2x128xf32> to vector<2x96xf32>
    %19 = arith.negf %18 : vector<2x96xf32>
    %20 = math.exp %19 : vector<2x96xf32>
    %cst_14 = arith.constant 1.000000e+00 : f32
    %21 = vector.broadcast %cst_14 : f32 to vector<2x96xf32>
    %22 = arith.addf %21, %20 : vector<2x96xf32>
    %23 = arith.divf %21, %22 : vector<2x96xf32>
    %24 = vector.extract_strided_slice %23 {offsets = [0, 0], sizes = [2, 32], strides = [1, 1]} : vector<2x96xf32> to vector<2x32xf32>
    %25 = vector.extract_strided_slice %23 {offsets = [0, 32], sizes = [2, 32], strides = [1, 1]} : vector<2x96xf32> to vector<2x32xf32>
    %26 = vector.extract_strided_slice %23 {offsets = [0, 64], sizes = [2, 32], strides = [1, 1]} : vector<2x96xf32> to vector<2x32xf32>
    %27 = vector.extract_strided_slice %17 {offsets = [0, 96], sizes = [2, 32], strides = [1, 1]} : vector<2x128xf32> to vector<2x32xf32>
    %28 = math.tanh %27 : vector<2x32xf32>
    %29 = arith.mulf %25, %12 : vector<2x32xf32>
    %30 = arith.mulf %24, %28 : vector<2x32xf32>
    %31 = arith.addf %29, %30 : vector<2x32xf32>
    %32 = math.tanh %31 : vector<2x32xf32>
    %33 = arith.mulf %26, %32 : vector<2x32xf32>
    %34 = arith.index_cast %c0_i32 : i32 to index
    %c0_15 = arith.constant 0 : index
    %c0_16 = arith.constant 0 : index
    %35 = vector.load %arg8[%34, %c0_15, %c0_16] : memref<8x2x32xf32, #tpu.memory_space<vmem>>, vector<1x2x32xf32>
    %36 = vector.shape_cast %35 : vector<1x2x32xf32> to vector<2x32xf32>
    %37 = vector.shape_cast %33 : vector<2x32xf32> to vector<1x2x32xf32>
    tpu.vector_store %arg8[%34, %c0_15, %c0_16], %37 {strides = array<i32>} : memref<8x2x32xf32, #tpu.memory_space<vmem>>, vector<1x2x32xf32>,
    %c1_i32 = arith.constant 1 : i32
    %38 = arith.index_cast %c1_i32 : i32 to index
    %c0_17 = arith.constant 0 : index
    %c0_18 = arith.constant 0 : index
    %39 = vector.load %arg7[%38, %c0_17, %c0_18] : memref<8x2x128xf32, #tpu.memory_space<vmem>>, vector<1x2x128xf32>
    %40 = vector.shape_cast %39 : vector<1x2x128xf32> to vector<2x128xf32>
    %cst_19 = arith.constant dense<0.000000e+00> : vector<2x128xf32>
    %41 = tpu.matmul %33, %11, %cst_19 {dimension_numbers = #tpu.dot_dimension_numbers<[1], [0], [0], [1], [0, 0, 1, 1], [], []>} : vector<2x32xf32>, vector<32x128xf32>, vector<2x128xf32> -> vector<2x128xf32>
    %42 = arith.addf %40, %41 : vector<2x128xf32>
    %43 = vector.extract_strided_slice %42 {offsets = [0, 0], sizes = [2, 96], strides = [1, 1]} : vector<2x128xf32> to vector<2x96xf32>
    %44 = arith.negf %43 : vector<2x96xf32>
    %45 = math.exp %44 : vector<2x96xf32>
    %cst_20 = arith.constant 1.000000e+00 : f32
    %46 = vector.broadcast %cst_20 : f32 to vector<2x96xf32>
    %47 = arith.addf %46, %45 : vector<2x96xf32>
    %48 = arith.divf %46, %47 : vector<2x96xf32>
    %49 = vector.extract_strided_slice %48 {offsets = [0, 0], sizes = [2, 32], strides = [1, 1]} : vector<2x96xf32> to vector<2x32xf32>
    %50 = vector.extract_strided_slice %48 {offsets = [0, 32], sizes = [2, 32], strides = [1, 1]} : vector<2x96xf32> to vector<2x32xf32>
    %51 = vector.extract_strided_slice %48 {offsets = [0, 64], sizes = [2, 32], strides = [1, 1]} : vector<2x96xf32> to vector<2x32xf32>
    %52 = vector.extract_strided_slice %42 {offsets = [0, 96], sizes = [2, 32], strides = [1, 1]} : vector<2x128xf32> to vector<2x32xf32>
    %53 = math.tanh %52 : vector<2x32xf32>
    %54 = arith.mulf %50, %31 : vector<2x32xf32>
    %55 = arith.mulf %49, %53 : vector<2x32xf32>
    %56 = arith.addf %54, %55 : vector<2x32xf32>
    %57 = math.tanh %56 : vector<2x32xf32>
    %58 = arith.mulf %51, %57 : vector<2x32xf32>
    %59 = arith.index_cast %c1_i32 : i32 to index
    %c0_21 = arith.constant 0 : index
    %c0_22 = arith.constant 0 : index
    %60 = vector.load %arg8[%59, %c0_21, %c0_22] : memref<8x2x32xf32, #tpu.memory_space<vmem>>, vector<1x2x32xf32>
    %61 = vector.shape_cast %60 : vector<1x2x32xf32> to vector<2x32xf32>
    %62 = vector.shape_cast %58 : vector<2x32xf32> to vector<1x2x32xf32>
    tpu.vector_store %arg8[%59, %c0_21, %c0_22], %62 {strides = array<i32>} : memref<8x2x32xf32, #tpu.memory_space<vmem>>, vector<1x2x32xf32>,
    %c2_i32 = arith.constant 2 : i32
    %63 = arith.index_cast %c2_i32 : i32 to index
    %c0_23 = arith.constant 0 : index
    %c0_24 = arith.constant 0 : index
    %64 = vector.load %arg7[%63, %c0_23, %c0_24] : memref<8x2x128xf32, #tpu.memory_space<vmem>>, vector<1x2x128xf32>
    %65 = vector.shape_cast %64 : vector<1x2x128xf32> to vector<2x128xf32>
    %cst_25 = arith.constant dense<0.000000e+00> : vector<2x128xf32>
    %66 = tpu.matmul %58, %11, %cst_25 {dimension_numbers = #tpu.dot_dimension_numbers<[1], [0], [0], [1], [0, 0, 1, 1], [], []>} : vector<2x32xf32>, vector<32x128xf32>, vector<2x128xf32> -> vector<2x128xf32>
    %67 = arith.addf %65, %66 : vector<2x128xf32>
    %68 = vector.extract_strided_slice %67 {offsets = [0, 0], sizes = [2, 96], strides = [1, 1]} : vector<2x128xf32> to vector<2x96xf32>
    %69 = arith.negf %68 : vector<2x96xf32>
    %70 = math.exp %69 : vector<2x96xf32>
    %cst_26 = arith.constant 1.000000e+00 : f32
    %71 = vector.broadcast %cst_26 : f32 to vector<2x96xf32>
    %72 = arith.addf %71, %70 : vector<2x96xf32>
    %73 = arith.divf %71, %72 : vector<2x96xf32>
    %74 = vector.extract_strided_slice %73 {offsets = [0, 0], sizes = [2, 32], strides = [1, 1]} : vector<2x96xf32> to vector<2x32xf32>
    %75 = vector.extract_strided_slice %73 {offsets = [0, 32], sizes = [2, 32], strides = [1, 1]} : vector<2x96xf32> to vector<2x32xf32>
    %76 = vector.extract_strided_slice %73 {offsets = [0, 64], sizes = [2, 32], strides = [1, 1]} : vector<2x96xf32> to vector<2x32xf32>
    %77 = vector.extract_strided_slice %67 {offsets = [0, 96], sizes = [2, 32], strides = [1, 1]} : vector<2x128xf32> to vector<2x32xf32>
    %78 = math.tanh %77 : vector<2x32xf32>
    %79 = arith.mulf %75, %56 : vector<2x32xf32>
    %80 = arith.mulf %74, %78 : vector<2x32xf32>
    %81 = arith.addf %79, %80 : vector<2x32xf32>
    %82 = math.tanh %81 : vector<2x32xf32>
    %83 = arith.mulf %76, %82 : vector<2x32xf32>
    %84 = arith.index_cast %c2_i32 : i32 to index
    %c0_27 = arith.constant 0 : index
    %c0_28 = arith.constant 0 : index
    %85 = vector.load %arg8[%84, %c0_27, %c0_28] : memref<8x2x32xf32, #tpu.memory_space<vmem>>, vector<1x2x32xf32>
    %86 = vector.shape_cast %85 : vector<1x2x32xf32> to vector<2x32xf32>
    %87 = vector.shape_cast %83 : vector<2x32xf32> to vector<1x2x32xf32>
    tpu.vector_store %arg8[%84, %c0_27, %c0_28], %87 {strides = array<i32>} : memref<8x2x32xf32, #tpu.memory_space<vmem>>, vector<1x2x32xf32>,
    %c3_i32 = arith.constant 3 : i32
    %88 = arith.index_cast %c3_i32 : i32 to index
    %c0_29 = arith.constant 0 : index
    %c0_30 = arith.constant 0 : index
    %89 = vector.load %arg7[%88, %c0_29, %c0_30] : memref<8x2x128xf32, #tpu.memory_space<vmem>>, vector<1x2x128xf32>
    %90 = vector.shape_cast %89 : vector<1x2x128xf32> to vector<2x128xf32>
    %cst_31 = arith.constant dense<0.000000e+00> : vector<2x128xf32>
    %91 = tpu.matmul %83, %11, %cst_31 {dimension_numbers = #tpu.dot_dimension_numbers<[1], [0], [0], [1], [0, 0, 1, 1], [], []>} : vector<2x32xf32>, vector<32x128xf32>, vector<2x128xf32> -> vector<2x128xf32>
    %92 = arith.addf %90, %91 : vector<2x128xf32>
    %93 = vector.extract_strided_slice %92 {offsets = [0, 0], sizes = [2, 96], strides = [1, 1]} : vector<2x128xf32> to vector<2x96xf32>
    %94 = arith.negf %93 : vector<2x96xf32>
    %95 = math.exp %94 : vector<2x96xf32>
    %cst_32 = arith.constant 1.000000e+00 : f32
    %96 = vector.broadcast %cst_32 : f32 to vector<2x96xf32>
    %97 = arith.addf %96, %95 : vector<2x96xf32>
    %98 = arith.divf %96, %97 : vector<2x96xf32>
    %99 = vector.extract_strided_slice %98 {offsets = [0, 0], sizes = [2, 32], strides = [1, 1]} : vector<2x96xf32> to vector<2x32xf32>
    %100 = vector.extract_strided_slice %98 {offsets = [0, 32], sizes = [2, 32], strides = [1, 1]} : vector<2x96xf32> to vector<2x32xf32>
    %101 = vector.extract_strided_slice %98 {offsets = [0, 64], sizes = [2, 32], strides = [1, 1]} : vector<2x96xf32> to vector<2x32xf32>
    %102 = vector.extract_strided_slice %92 {offsets = [0, 96], sizes = [2, 32], strides = [1, 1]} : vector<2x128xf32> to vector<2x32xf32>
    %103 = math.tanh %102 : vector<2x32xf32>
    %104 = arith.mulf %100, %81 : vector<2x32xf32>
    %105 = arith.mulf %99, %103 : vector<2x32xf32>
    %106 = arith.addf %104, %105 : vector<2x32xf32>
    %107 = math.tanh %106 : vector<2x32xf32>
    %108 = arith.mulf %101, %107 : vector<2x32xf32>
    %109 = arith.index_cast %c3_i32 : i32 to index
    %c0_33 = arith.constant 0 : index
    %c0_34 = arith.constant 0 : index
    %110 = vector.load %arg8[%109, %c0_33, %c0_34] : memref<8x2x32xf32, #tpu.memory_space<vmem>>, vector<1x2x32xf32>
    %111 = vector.shape_cast %110 : vector<1x2x32xf32> to vector<2x32xf32>
    %112 = vector.shape_cast %108 : vector<2x32xf32> to vector<1x2x32xf32>
    tpu.vector_store %arg8[%109, %c0_33, %c0_34], %112 {strides = array<i32>} : memref<8x2x32xf32, #tpu.memory_space<vmem>>, vector<1x2x32xf32>,
    %c4_i32 = arith.constant 4 : i32
    %113 = arith.index_cast %c4_i32 : i32 to index
    %c0_35 = arith.constant 0 : index
    %c0_36 = arith.constant 0 : index
    %114 = vector.load %arg7[%113, %c0_35, %c0_36] : memref<8x2x128xf32, #tpu.memory_space<vmem>>, vector<1x2x128xf32>
    %115 = vector.shape_cast %114 : vector<1x2x128xf32> to vector<2x128xf32>
    %cst_37 = arith.constant dense<0.000000e+00> : vector<2x128xf32>
    %116 = tpu.matmul %108, %11, %cst_37 {dimension_numbers = #tpu.dot_dimension_numbers<[1], [0], [0], [1], [0, 0, 1, 1], [], []>} : vector<2x32xf32>, vector<32x128xf32>, vector<2x128xf32> -> vector<2x128xf32>
    %117 = arith.addf %115, %116 : vector<2x128xf32>
    %118 = vector.extract_strided_slice %117 {offsets = [0, 0], sizes = [2, 96], strides = [1, 1]} : vector<2x128xf32> to vector<2x96xf32>
    %119 = arith.negf %118 : vector<2x96xf32>
    %120 = math.exp %119 : vector<2x96xf32>
    %cst_38 = arith.constant 1.000000e+00 : f32
    %121 = vector.broadcast %cst_38 : f32 to vector<2x96xf32>
    %122 = arith.addf %121, %120 : vector<2x96xf32>
    %123 = arith.divf %121, %122 : vector<2x96xf32>
    %124 = vector.extract_strided_slice %123 {offsets = [0, 0], sizes = [2, 32], strides = [1, 1]} : vector<2x96xf32> to vector<2x32xf32>
    %125 = vector.extract_strided_slice %123 {offsets = [0, 32], sizes = [2, 32], strides = [1, 1]} : vector<2x96xf32> to vector<2x32xf32>
    %126 = vector.extract_strided_slice %123 {offsets = [0, 64], sizes = [2, 32], strides = [1, 1]} : vector<2x96xf32> to vector<2x32xf32>
    %127 = vector.extract_strided_slice %117 {offsets = [0, 96], sizes = [2, 32], strides = [1, 1]} : vector<2x128xf32> to vector<2x32xf32>
    %128 = math.tanh %127 : vector<2x32xf32>
    %129 = arith.mulf %125, %106 : vector<2x32xf32>
    %130 = arith.mulf %124, %128 : vector<2x32xf32>
    %131 = arith.addf %129, %130 : vector<2x32xf32>
    %132 = math.tanh %131 : vector<2x32xf32>
    %133 = arith.mulf %126, %132 : vector<2x32xf32>
    %134 = arith.index_cast %c4_i32 : i32 to index
    %c0_39 = arith.constant 0 : index
    %c0_40 = arith.constant 0 : index
    %135 = vector.load %arg8[%134, %c0_39, %c0_40] : memref<8x2x32xf32, #tpu.memory_space<vmem>>, vector<1x2x32xf32>
    %136 = vector.shape_cast %135 : vector<1x2x32xf32> to vector<2x32xf32>
    %137 = vector.shape_cast %133 : vector<2x32xf32> to vector<1x2x32xf32>
    tpu.vector_store %arg8[%134, %c0_39, %c0_40], %137 {strides = array<i32>} : memref<8x2x32xf32, #tpu.memory_space<vmem>>, vector<1x2x32xf32>,
    %c5_i32 = arith.constant 5 : i32
    %138 = arith.index_cast %c5_i32 : i32 to index
    %c0_41 = arith.constant 0 : index
    %c0_42 = arith.constant 0 : index
    %139 = vector.load %arg7[%138, %c0_41, %c0_42] : memref<8x2x128xf32, #tpu.memory_space<vmem>>, vector<1x2x128xf32>
    %140 = vector.shape_cast %139 : vector<1x2x128xf32> to vector<2x128xf32>
    %cst_43 = arith.constant dense<0.000000e+00> : vector<2x128xf32>
    %141 = tpu.matmul %133, %11, %cst_43 {dimension_numbers = #tpu.dot_dimension_numbers<[1], [0], [0], [1], [0, 0, 1, 1], [], []>} : vector<2x32xf32>, vector<32x128xf32>, vector<2x128xf32> -> vector<2x128xf32>
    %142 = arith.addf %140, %141 : vector<2x128xf32>
    %143 = vector.extract_strided_slice %142 {offsets = [0, 0], sizes = [2, 96], strides = [1, 1]} : vector<2x128xf32> to vector<2x96xf32>
    %144 = arith.negf %143 : vector<2x96xf32>
    %145 = math.exp %144 : vector<2x96xf32>
    %cst_44 = arith.constant 1.000000e+00 : f32
    %146 = vector.broadcast %cst_44 : f32 to vector<2x96xf32>
    %147 = arith.addf %146, %145 : vector<2x96xf32>
    %148 = arith.divf %146, %147 : vector<2x96xf32>
    %149 = vector.extract_strided_slice %148 {offsets = [0, 0], sizes = [2, 32], strides = [1, 1]} : vector<2x96xf32> to vector<2x32xf32>
    %150 = vector.extract_strided_slice %148 {offsets = [0, 32], sizes = [2, 32], strides = [1, 1]} : vector<2x96xf32> to vector<2x32xf32>
    %151 = vector.extract_strided_slice %148 {offsets = [0, 64], sizes = [2, 32], strides = [1, 1]} : vector<2x96xf32> to vector<2x32xf32>
    %152 = vector.extract_strided_slice %142 {offsets = [0, 96], sizes = [2, 32], strides = [1, 1]} : vector<2x128xf32> to vector<2x32xf32>
    %153 = math.tanh %152 : vector<2x32xf32>
    %154 = arith.mulf %150, %131 : vector<2x32xf32>
    %155 = arith.mulf %149, %153 : vector<2x32xf32>
    %156 = arith.addf %154, %155 : vector<2x32xf32>
    %157 = math.tanh %156 : vector<2x32xf32>
    %158 = arith.mulf %151, %157 : vector<2x32xf32>
    %159 = arith.index_cast %c5_i32 : i32 to index
    %c0_45 = arith.constant 0 : index
    %c0_46 = arith.constant 0 : index
    %160 = vector.load %arg8[%159, %c0_45, %c0_46] : memref<8x2x32xf32, #tpu.memory_space<vmem>>, vector<1x2x32xf32>
    %161 = vector.shape_cast %160 : vector<1x2x32xf32> to vector<2x32xf32>
    %162 = vector.shape_cast %158 : vector<2x32xf32> to vector<1x2x32xf32>
    tpu.vector_store %arg8[%159, %c0_45, %c0_46], %162 {strides = array<i32>} : memref<8x2x32xf32, #tpu.memory_space<vmem>>, vector<1x2x32xf32>,
    %c6_i32 = arith.constant 6 : i32
    %163 = arith.index_cast %c6_i32 : i32 to index
    %c0_47 = arith.constant 0 : index
    %c0_48 = arith.constant 0 : index
    %164 = vector.load %arg7[%163, %c0_47, %c0_48] : memref<8x2x128xf32, #tpu.memory_space<vmem>>, vector<1x2x128xf32>
    %165 = vector.shape_cast %164 : vector<1x2x128xf32> to vector<2x128xf32>
    %cst_49 = arith.constant dense<0.000000e+00> : vector<2x128xf32>
    %166 = tpu.matmul %158, %11, %cst_49 {dimension_numbers = #tpu.dot_dimension_numbers<[1], [0], [0], [1], [0, 0, 1, 1], [], []>} : vector<2x32xf32>, vector<32x128xf32>, vector<2x128xf32> -> vector<2x128xf32>
    %167 = arith.addf %165, %166 : vector<2x128xf32>
    %168 = vector.extract_strided_slice %167 {offsets = [0, 0], sizes = [2, 96], strides = [1, 1]} : vector<2x128xf32> to vector<2x96xf32>
    %169 = arith.negf %168 : vector<2x96xf32>
    %170 = math.exp %169 : vector<2x96xf32>
    %cst_50 = arith.constant 1.000000e+00 : f32
    %171 = vector.broadcast %cst_50 : f32 to vector<2x96xf32>
    %172 = arith.addf %171, %170 : vector<2x96xf32>
    %173 = arith.divf %171, %172 : vector<2x96xf32>
    %174 = vector.extract_strided_slice %173 {offsets = [0, 0], sizes = [2, 32], strides = [1, 1]} : vector<2x96xf32> to vector<2x32xf32>
    %175 = vector.extract_strided_slice %173 {offsets = [0, 32], sizes = [2, 32], strides = [1, 1]} : vector<2x96xf32> to vector<2x32xf32>
    %176 = vector.extract_strided_slice %173 {offsets = [0, 64], sizes = [2, 32], strides = [1, 1]} : vector<2x96xf32> to vector<2x32xf32>
    %177 = vector.extract_strided_slice %167 {offsets = [0, 96], sizes = [2, 32], strides = [1, 1]} : vector<2x128xf32> to vector<2x32xf32>
    %178 = math.tanh %177 : vector<2x32xf32>
    %179 = arith.mulf %175, %156 : vector<2x32xf32>
    %180 = arith.mulf %174, %178 : vector<2x32xf32>
    %181 = arith.addf %179, %180 : vector<2x32xf32>
    %182 = math.tanh %181 : vector<2x32xf32>
    %183 = arith.mulf %176, %182 : vector<2x32xf32>
    %184 = arith.index_cast %c6_i32 : i32 to index
    %c0_51 = arith.constant 0 : index
    %c0_52 = arith.constant 0 : index
    %185 = vector.load %arg8[%184, %c0_51, %c0_52] : memref<8x2x32xf32, #tpu.memory_space<vmem>>, vector<1x2x32xf32>
    %186 = vector.shape_cast %185 : vector<1x2x32xf32> to vector<2x32xf32>
    %187 = vector.shape_cast %183 : vector<2x32xf32> to vector<1x2x32xf32>
    tpu.vector_store %arg8[%184, %c0_51, %c0_52], %187 {strides = array<i32>} : memref<8x2x32xf32, #tpu.memory_space<vmem>>, vector<1x2x32xf32>,
    %c7_i32 = arith.constant 7 : i32
    %188 = arith.index_cast %c7_i32 : i32 to index
    %c0_53 = arith.constant 0 : index
    %c0_54 = arith.constant 0 : index
    %189 = vector.load %arg7[%188, %c0_53, %c0_54] : memref<8x2x128xf32, #tpu.memory_space<vmem>>, vector<1x2x128xf32>
    %190 = vector.shape_cast %189 : vector<1x2x128xf32> to vector<2x128xf32>
    %cst_55 = arith.constant dense<0.000000e+00> : vector<2x128xf32>
    %191 = tpu.matmul %183, %11, %cst_55 {dimension_numbers = #tpu.dot_dimension_numbers<[1], [0], [0], [1], [0, 0, 1, 1], [], []>} : vector<2x32xf32>, vector<32x128xf32>, vector<2x128xf32> -> vector<2x128xf32>
    %192 = arith.addf %190, %191 : vector<2x128xf32>
    %193 = vector.extract_strided_slice %192 {offsets = [0, 0], sizes = [2, 96], strides = [1, 1]} : vector<2x128xf32> to vector<2x96xf32>
    %194 = arith.negf %193 : vector<2x96xf32>
    %195 = math.exp %194 : vector<2x96xf32>
    %cst_56 = arith.constant 1.000000e+00 : f32
    %196 = vector.broadcast %cst_56 : f32 to vector<2x96xf32>
    %197 = arith.addf %196, %195 : vector<2x96xf32>
    %198 = arith.divf %196, %197 : vector<2x96xf32>
    %199 = vector.extract_strided_slice %198 {offsets = [0, 0], sizes = [2, 32], strides = [1, 1]} : vector<2x96xf32> to vector<2x32xf32>
    %200 = vector.extract_strided_slice %198 {offsets = [0, 32], sizes = [2, 32], strides = [1, 1]} : vector<2x96xf32> to vector<2x32xf32>
    %201 = vector.extract_strided_slice %198 {offsets = [0, 64], sizes = [2, 32], strides = [1, 1]} : vector<2x96xf32> to vector<2x32xf32>
    %202 = vector.extract_strided_slice %192 {offsets = [0, 96], sizes = [2, 32], strides = [1, 1]} : vector<2x128xf32> to vector<2x32xf32>
    %203 = math.tanh %202 : vector<2x32xf32>
    %204 = arith.mulf %200, %181 : vector<2x32xf32>
    %205 = arith.mulf %199, %203 : vector<2x32xf32>
    %206 = arith.addf %204, %205 : vector<2x32xf32>
    %207 = math.tanh %206 : vector<2x32xf32>
    %208 = arith.mulf %201, %207 : vector<2x32xf32>
    %209 = arith.index_cast %c7_i32 : i32 to index
    %c0_57 = arith.constant 0 : index
    %c0_58 = arith.constant 0 : index
    %210 = vector.load %arg8[%209, %c0_57, %c0_58] : memref<8x2x32xf32, #tpu.memory_space<vmem>>, vector<1x2x32xf32>
    %211 = vector.shape_cast %210 : vector<1x2x32xf32> to vector<2x32xf32>
    %212 = vector.shape_cast %208 : vector<2x32xf32> to vector<1x2x32xf32>
    tpu.vector_store %arg8[%209, %c0_57, %c0_58], %212 {strides = array<i32>} : memref<8x2x32xf32, #tpu.memory_space<vmem>>, vector<1x2x32xf32>,
    %c8_i32 = arith.constant 8 : i32
    %c0_59 = arith.constant 0 : index
    %c0_60 = arith.constant 0 : index
    %213 = vector.load %arg4[%c0_59, %c0_60] : memref<1x32xf32, #tpu.memory_space<vmem>>, vector<1x32xf32>
    %214 = vector.shape_cast %213 : vector<1x32xf32> to vector<1x1x32xf32>
    %c0_61 = arith.constant 0 : index
    %c0_62 = arith.constant 0 : index
    %c0_63 = arith.constant 0 : index
    %215 = vector.load %arg8[%c0_61, %c0_62, %c0_63] : memref<8x2x32xf32, #tpu.memory_space<vmem>>, vector<8x2x32xf32>
    %216 = vector.broadcast %214 : vector<1x1x32xf32> to vector<8x2x32xf32>
    %217 = arith.mulf %215, %216 : vector<8x2x32xf32>
    %cst_64 = arith.constant dense<0.000000e+00> : vector<8x2xf32>
    %218 = vector.multi_reduction <add>, %217, %cst_64 [2] : vector<8x2x32xf32> to vector<8x2xf32>
    %c0_65 = arith.constant 0 : index
    %c0_66 = arith.constant 0 : index
    %219 = memref.load %arg5[%c0_65, %c0_66] : memref<1x1xf32, #tpu.memory_space<smem>>
    %220 = vector.broadcast %219 : f32 to vector<8x2xf32>
    %221 = arith.addf %218, %220 : vector<8x2xf32>
    %c0_67 = arith.constant 0 : index
    %c0_68 = arith.constant 0 : index
    %222 = vector.load %arg6[%c0_67, %c0_68] : memref<8x2xf32, #tpu.memory_space<vmem>>, vector<8x2xf32>
    tpu.vector_store %arg6[%c0_67, %c0_68], %221 {strides = array<i32>} : memref<8x2xf32, #tpu.memory_space<vmem>>, vector<8x2xf32>,
    return
  }
}

</mosaic_0001>

<llo_original>
// kernel: tpu_custom_call.1
$region0: #{tpu_custom_call.1}
  #allocation0 [shape = 'u32[]', space=smem, size = 0x4, offset = 0x4, fixed_abs, tag = 'smem constant byte address 0x4 - core index']
  #allocation1 [shape = 'u32[144,128]{1,0:T(1,128)}', space=vmem, size = 0x12000, scoped, tag = 'internal scratch']
  #allocation2 [shape = 'f32[8,2,128]{2,1,0:T(2,128)}', space=vmem, size = 0x2000, scoped, tag = 'scratch operand']
  #allocation3 [shape = 'f32[8,2,32]{2,1,0:T(2,128)}', space=vmem, size = 0x2000, scoped, tag = 'scratch operand']
  #allocation4 [shape = 'f32[1,1]{1,0:T(1,128)S(6)}', space=smem, size = 0x200, scoped, tag = 'scoped memory for tpu_custom_call.1']
  %s0 = inlined_call_operand.vmem [shape: f32[8,2,1], index: 0, kind: input, shape index: {}]
  %s1 = inlined_call_operand.vmem [shape: f32[1,128], index: 1, kind: input, shape index: {}]
  %s2 = inlined_call_operand.hbm [shape: f32[32,128], index: 2, kind: input, shape index: {}]
  %s3 = inlined_call_operand.vmem [shape: f32[1,128], index: 3, kind: input, shape index: {}]
  %s4 = inlined_call_operand.vmem [shape: f32[1,32], index: 4, kind: input, shape index: {}]
  %s5 = inlined_call_operand.<no memory space> [shape: f32[1,1], index: 5, kind: input, shape index: {}]
  %s6 = inlined_call_operand.vmem [shape: f32[8,2], index: 6, kind: output, shape index: {}]
  %s7 = sld [smem:[#allocation0]]
  $region38: #{tpu_custom_call.1} parent=0
    _
  %s9 = ssub.s32 1, %s7
  %s10 = scalar_select 0, %s9, %s7
  %11 = sst [smem:[#allocation4]] %s5
  $region1: #{tpu_custom_call.1} parent=0
    #allocation5 [shape = 'u8[16384]{0}', space=vmem, size = 0x4000, scoped, tag = 'input window, operand 2, single buffered']
    #allocation6 [shape = 's32[1]{0}', space=sflag, size = 0x4, scoped, tag = 'scoped memory for tpu_custom_call.1']
    %12 = vsyncpa [#allocation6], 0
    // Predicated region
    $region2: #{tpu_custom_call.1} parent=1 // pred_check
      _
    $region3: #{tpu_custom_call.1} parent=1 // pred_check_branch
      %14 = sbr.rel (0) target = $region5
    $region4: #{tpu_custom_call.1} parent=1 // pred_region
      _
    $region5: #{tpu_custom_call.1} parent=1 // pred_fallthru
      _
    // Predicated region
    $region6: #{tpu_custom_call.1} parent=1 // pred_check
      _
    $region7: #{tpu_custom_call.1} parent=1 // pred_check_branch
      %16 = sbr.rel (0) target = $region9
    $region8: #{tpu_custom_call.1} parent=1 // pred_region
      _
    $region9: #{tpu_custom_call.1} parent=1 // pred_fallthru
      _
    // Predicated region
    $region10: #{tpu_custom_call.1} parent=1 // pred_check
      _
    $region11: #{tpu_custom_call.1} parent=1 // pred_check_branch
      %18 = sbr.rel (0) target = $region13
    $region12: #{tpu_custom_call.1} parent=1 // pred_region
      %s20 = ssub.s32 512, 512
      %21 = vsyncadd [#allocation6], %s20
      %s22 = sshll.u32 [#allocation5], 4
      %s23 = int_to_ptr.vmem [resolvable:$true] %s22
      %28 = dma.hbm_to_vmem [thread:$0]  %s2, 512, %s23, [#allocation6], 128, 128, 8
    $region13: #{tpu_custom_call.1} parent=1 // pred_fallthru
      _
    // Predicated region
    $region14: #{tpu_custom_call.1} parent=1 // pred_check
      _
    $region15: #{tpu_custom_call.1} parent=1 // pred_check_branch
      %30 = sbr.rel (0) target = $region17
    $region16: #{tpu_custom_call.1} parent=1 // pred_region
      _
    $region17: #{tpu_custom_call.1} parent=1 // pred_fallthru
      _
    // Predicated region
    $region18: #{tpu_custom_call.1} parent=1 // pred_check
      _
    $region19: #{tpu_custom_call.1} parent=1 // pred_check_branch
      %32 = sbr.rel (0) target = $region21
    $region20: #{tpu_custom_call.1} parent=1 // pred_region
      _
    $region21: #{tpu_custom_call.1} parent=1 // pred_fallthru
      _
    // Predicated region
    $region22: #{tpu_custom_call.1} parent=1 // pred_check
      _
    $region23: #{tpu_custom_call.1} parent=1 // pred_check_branch
      %34 = sbr.rel (0) target = $region25
    $region24: #{tpu_custom_call.1} parent=1 // pred_region
      _
    $region25: #{tpu_custom_call.1} parent=1 // pred_fallthru
      _
    // Predicated region
    $region26: #{tpu_custom_call.1} parent=1 // pred_check
      _
    $region27: #{tpu_custom_call.1} parent=1 // pred_check_branch
      %36 = sbr.rel (0) target = $region29
    $region28: #{tpu_custom_call.1} parent=1 // pred_region
      %37 = dma.done [#allocation6], 512
    $region29: #{tpu_custom_call.1} parent=1 // pred_fallthru
      _
    %v38 = vld [vmem:[%s0] sm:$0x3]
    %v39 = vld [vmem:[%s0 + $0x2] sm:$0x3]
    %v40 = vld [vmem:[%s0 + $0x4] sm:$0x3]
    %v41 = vld [vmem:[%s0 + $0x6] sm:$0x3]
    %v42 = vld [vmem:[%s0 + $0x8] sm:$0x3]
    %v43 = vld [vmem:[%s0 + $0xa] sm:$0x3]
    %v44 = vld [vmem:[%s0 + $0xc] sm:$0x3]
    %v45 = vld [vmem:[%s0 + $0xe] sm:$0x3]
    %v46 = vld [vmem:[%s1] sm:$0x1]
    %48 = vset.pattern.permute.xlu0 0
    %49 = vperm.xlu0 %48, %v38
    %v50 = vpop.permute.xlu0 %49
    %53 = vset.pattern.permute.xlu0 0
    %54 = vperm.xlu0 %53, %v39
    %v55 = vpop.permute.xlu0 %54
    %58 = vset.pattern.permute.xlu0 0
    %59 = vperm.xlu0 %58, %v40
    %v60 = vpop.permute.xlu0 %59
    %63 = vset.pattern.permute.xlu0 0
    %64 = vperm.xlu0 %63, %v41
    %v65 = vpop.permute.xlu0 %64
    %68 = vset.pattern.permute.xlu0 0
    %69 = vperm.xlu0 %68, %v42
    %v70 = vpop.permute.xlu0 %69
    %73 = vset.pattern.permute.xlu0 0
    %74 = vperm.xlu0 %73, %v43
    %v75 = vpop.permute.xlu0 %74
    %78 = vset.pattern.permute.xlu0 0
    %79 = vperm.xlu0 %78, %v44
    %v80 = vpop.permute.xlu0 %79
    %83 = vset.pattern.permute.xlu0 0
    %84 = vperm.xlu0 %83, %v45
    %v85 = vpop.permute.xlu0 %84
    %v88 = vlaneseq
    %v89 = vshrl.u32 %v88, 7
    %v90 = vsub.s32 0, %v89
    %v91 = vrot.slane %v46, %v90
    %v93 = vmul.f32 %v50, %v91
    %v94 = vmul.f32 %v55, %v91
    %v95 = vmul.f32 %v60, %v91
    %v96 = vmul.f32 %v65, %v91
    %v97 = vmul.f32 %v70, %v91
    %v98 = vmul.f32 %v75, %v91
    %v99 = vmul.f32 %v80, %v91
    %v100 = vmul.f32 %v85, %v91
    %v101 = vld [vmem:[%s3] sm:$0x1]
    %v103 = vlaneseq
    %v104 = vshrl.u32 %v103, 7
    %v105 = vsub.s32 0, %v104
    %v106 = vrot.slane %v101, %v105
    %v108 = vadd.f32 %v93, %v106
    %v109 = vadd.f32 %v94, %v106
    %v110 = vadd.f32 %v95, %v106
    %v111 = vadd.f32 %v96, %v106
    %v112 = vadd.f32 %v97, %v106
    %v113 = vadd.f32 %v98, %v106
    %v114 = vadd.f32 %v99, %v106
    %v115 = vadd.f32 %v100, %v106
    %116 = vst [vmem:[#allocation2] sm:$0x3] %v108
    %117 = vst [vmem:[#allocation2 + $0x2] sm:$0x3] %v109
    %118 = vst [vmem:[#allocation2 + $0x4] sm:$0x3] %v110
    %119 = vst [vmem:[#allocation2 + $0x6] sm:$0x3] %v111
    %120 = vst [vmem:[#allocation2 + $0x8] sm:$0x3] %v112
    %121 = vst [vmem:[#allocation2 + $0xa] sm:$0x3] %v113
    %122 = vst [vmem:[#allocation2 + $0xc] sm:$0x3] %v114
    %123 = vst [vmem:[#allocation2 + $0xe] sm:$0x3] %v115
    %v124 = vld [vmem:[#allocation5] sm:$0xff]
    %v125 = vld [vmem:[#allocation5 + $0x8] sm:$0xff]
    %v126 = vld [vmem:[#allocation5 + $0x10] sm:$0xff]
    %v127 = vld [vmem:[#allocation5 + $0x18] sm:$0xff]
    %v128 = vld [vmem:[#allocation2] sm:$0x3]
    %vm129 = vcmask 261120
    %v131 = vsel %vm129, 0.0, 0
    %133 = vmatprep.subr.mxu0 0.0
    %134 = vmatpush1.msra.mxu0 0.0
    %135 = vmatprep.subr.mxu0 0.0
    %136 = vmatpush1.msra.mxu0 0.0
    %137 = vmatprep.subr.mxu0 0.0
    %138 = vmatpush1.msra.mxu0 0.0
    %139 = vmatprep.subr.mxu0 0.0
    %140 = vmatpush1.msra.mxu0 0.0
    %141 = vmatprep.subr.mxu0 0.0
    %142 = vmatpush1.msra.mxu0 0.0
    %143 = vmatprep.subr.mxu0 0.0
    %144 = vmatpush1.msra.mxu0 0.0
    %145 = vmatprep.subr.mxu0 0.0
    %146 = vmatpush1.msra.mxu0 0.0
    %147 = vmatprep.subr.mxu0 0.0
    %148 = vmatpush1.msra.mxu0 0.0
    %149 = vmatprep.subr.mxu0 0.0
    %150 = vmatpush1.msra.mxu0 0.0
    %151 = vmatprep.subr.mxu0 0.0
    %152 = vmatpush1.msra.mxu0 0.0
    %153 = vmatprep.subr.mxu0 0.0
    %154 = vmatpush1.msra.mxu0 0.0
    %155 = vmatprep.subr.mxu0 0.0
    %156 = vmatpush1.msra.mxu0 0.0
    %157 = vmatprep.subr.mxu0 0.0
    %158 = vmatpush1.msra.mxu0 %v127
    %159 = vmatprep.subr.mxu0 0.0
    %160 = vmatpush1.msra.mxu0 %v126
    %161 = vmatprep.subr.mxu0 0.0
    %162 = vmatpush1.msra.mxu0 %v125
    %163 = vmatprep.subr.mxu0 0.0
    %164 = vmatpush1.msra.mxu0 %v124
    %165 = vmatprep.subr.mxu0 0.0
    %166 = vmatpush2.msra.mxu0 0.0
    %167 = vmatprep.subr.mxu0 0.0
    %168 = vmatpush2.msra.mxu0 0.0
    %169 = vmatprep.subr.mxu0 0.0
    %170 = vmatpush2.msra.mxu0 0.0
    %171 = vmatprep.subr.mxu0 0.0
    %172 = vmatpush2.msra.mxu0 0.0
    %173 = vmatprep.subr.mxu0 0.0
    %174 = vmatpush2.msra.mxu0 0.0
    %175 = vmatprep.subr.mxu0 0.0
    %176 = vmatpush2.msra.mxu0 0.0
    %177 = vmatprep.subr.mxu0 0.0
    %178 = vmatpush2.msra.mxu0 0.0
    %179 = vmatprep.subr.mxu0 0.0
    %180 = vmatpush2.msra.mxu0 0.0
    %181 = vmatprep.subr.mxu0 0.0
    %182 = vmatpush2.msra.mxu0 0.0
    %183 = vmatprep.subr.mxu0 0.0
    %184 = vmatpush2.msra.mxu0 0.0
    %185 = vmatprep.subr.mxu0 0.0
    %186 = vmatpush2.msra.mxu0 0.0
    %187 = vmatprep.subr.mxu0 0.0
    %188 = vmatpush2.msra.mxu0 0.0
    %189 = vmatprep.subr.mxu0 0.0
    %190 = vmatpush2.msra.mxu0 0.0
    %191 = vmatprep.subr.mxu0 0.0
    %192 = vmatpush2.msra.mxu0 0.0
    %193 = vmatprep.subr.mxu0 0.0
    %194 = vmatpush2.msra.mxu0 0.0
    %195 = vmatprep.subr.mxu0 0.0
    %196 = vmatpush2.msra.mxu0 0.0
    %197 = vmatprep.mubr.f32.mxu0 0.0
    %198 = vmatmul.mubr.f32.gmra.mxu0 %v131
    %v199 = vpop.f32.mrf.mxu0
    %v200 = vadd.f32 0.0, %v199
    %v201 = vpop.f32.mrf.mxu0
    %202 = vdwg.mxu0
    %v203 = vadd.f32 %v128, %v200
    %v204 = vxor.u32 %v203, 2147483648
    %v205 = vmul.f32 %v204, 1.442695
    %v206 = vpow.pop %v205
    %v207 = vadd.f32 %v206, 1.0
    %v208 = vrcp.pop %v207
    %v209 = vmul.f32 1.0, %v208
    %v210 = vtanh.pop %v203
    %v211 = vmul.f32 %v209, 0.0
    %213 = vrot.lane.b32.xlu0 %v210, 32
    %v214 = vpop.permute.xlu0 %213
    %v216 = vmul.f32 %v209, %v214
    %218 = vrot.lane.b32.xlu0 %v216, 32
    %v219 = vpop.permute.xlu0 %218
    %v221 = vadd.f32 %v211, %v219
    %v222 = vtanh.pop %v221
    %224 = vrot.lane.b32.xlu0 %v222, 32
    %v225 = vpop.permute.xlu0 %224
    %v227 = vmul.f32 %v209, %v225
    %229 = vrot.lane.b32.xlu0 %v227, 64
    %v230 = vpop.permute.xlu0 %229
    %vm232 = vcmask 254976
    %233 = vst.msk [vmem:[#allocation3] sm:$0x3] %vm232, %v230
    %s234 = scalar_lea.vmem [#allocation2], 2
    %v235 = vld [vmem:[%s234] sm:$0x3]
    %v236 = vsel %vm129, %v230, 0
    %238 = vmatprep.subr.mxu0 0.0
    %239 = vmatpush1.msra.mxu0 0.0
    %240 = vmatprep.subr.mxu0 0.0
    %241 = vmatpush1.msra.mxu0 0.0
    %242 = vmatprep.subr.mxu0 0.0
    %243 = vmatpush1.msra.mxu0 0.0
    %244 = vmatprep.subr.mxu0 0.0
    %245 = vmatpush1.msra.mxu0 0.0
    %246 = vmatprep.subr.mxu0 0.0
    %247 = vmatpush1.msra.mxu0 0.0
    %248 = vmatprep.subr.mxu0 0.0
    %249 = vmatpush1.msra.mxu0 0.0
    %250 = vmatprep.subr.mxu0 0.0
    %251 = vmatpush1.msra.mxu0 0.0
    %252 = vmatprep.subr.mxu0 0.0
    %253 = vmatpush1.msra.mxu0 0.0
    %254 = vmatprep.subr.mxu0 0.0
    %255 = vmatpush1.msra.mxu0 0.0
    %256 = vmatprep.subr.mxu0 0.0
    %257 = vmatpush1.msra.mxu0 0.0
    %258 = vmatprep.subr.mxu0 0.0
    %259 = vmatpush1.msra.mxu0 0.0
    %260 = vmatprep.subr.mxu0 0.0
    %261 = vmatpush1.msra.mxu0 0.0
    %262 = vmatprep.subr.mxu0 0.0
    %263 = vmatpush1.msra.mxu0 %v127
    %264 = vmatprep.subr.mxu0 0.0
    %265 = vmatpush1.msra.mxu0 %v126
    %266 = vmatprep.subr.mxu0 0.0
    %267 = vmatpush1.msra.mxu0 %v125
    %268 = vmatprep.subr.mxu0 0.0
    %269 = vmatpush1.msra.mxu0 %v124
    %270 = vmatprep.subr.mxu0 0.0
    %271 = vmatpush2.msra.mxu0 0.0
    %272 = vmatprep.subr.mxu0 0.0
    %273 = vmatpush2.msra.mxu0 0.0
    %274 = vmatprep.subr.mxu0 0.0
    %275 = vmatpush2.msra.mxu0 0.0
    %276 = vmatprep.subr.mxu0 0.0
    %277 = vmatpush2.msra.mxu0 0.0
    %278 = vmatprep.subr.mxu0 0.0
    %279 = vmatpush2.msra.mxu0 0.0
    %280 = vmatprep.subr.mxu0 0.0
    %281 = vmatpush2.msra.mxu0 0.0
    %282 = vmatprep.subr.mxu0 0.0
    %283 = vmatpush2.msra.mxu0 0.0
    %284 = vmatprep.subr.mxu0 0.0
    %285 = vmatpush2.msra.mxu0 0.0
    %286 = vmatprep.subr.mxu0 0.0
    %287 = vmatpush2.msra.mxu0 0.0
    %288 = vmatprep.subr.mxu0 0.0
    %289 = vmatpush2.msra.mxu0 0.0
    %290 = vmatprep.subr.mxu0 0.0
    %291 = vmatpush2.msra.mxu0 0.0
    %292 = vmatprep.subr.mxu0 0.0
    %293 = vmatpush2.msra.mxu0 0.0
    %294 = vmatprep.subr.mxu0 0.0
    %295 = vmatpush2.msra.mxu0 0.0
    %296 = vmatprep.subr.mxu0 0.0
    %297 = vmatpush2.msra.mxu0 0.0
    %298 = vmatprep.subr.mxu0 0.0
    %299 = vmatpush2.msra.mxu0 0.0
    %300 = vmatprep.subr.mxu0 0.0
    %301 = vmatpush2.msra.mxu0 0.0
    %302 = vmatprep.mubr.f32.mxu0 0.0
    %303 = vmatmul.mubr.f32.gmra.mxu0 %v236
    %v304 = vpop.f32.mrf.mxu0
    %v305 = vadd.f32 0.0, %v304
    %v306 = vpop.f32.mrf.mxu0
    %307 = vdwg.mxu0
    %v308 = vadd.f32 %v235, %v305
    %v309 = vxor.u32 %v308, 2147483648
    %v310 = vmul.f32 %v309, 1.442695
    %v311 = vpow.pop %v310
    %v312 = vadd.f32 %v311, 1.0
    %v313 = vrcp.pop %v312
    %v314 = vmul.f32 1.0, %v313
    %v315 = vtanh.pop %v308
    %v316 = vmul.f32 %v314, %v221
    %318 = vrot.lane.b32.xlu0 %v315, 32
    %v319 = vpop.permute.xlu0 %318
    %v321 = vmul.f32 %v314, %v319
    %323 = vrot.lane.b32.xlu0 %v321, 32
    %v324 = vpop.permute.xlu0 %323
    %v326 = vadd.f32 %v316, %v324
    %v327 = vtanh.pop %v326
    %329 = vrot.lane.b32.xlu0 %v327, 32
    %v330 = vpop.permute.xlu0 %329
    %v332 = vmul.f32 %v314, %v330
    %334 = vrot.lane.b32.xlu0 %v332, 64
    %v335 = vpop.permute.xlu0 %334
    %s337 = scalar_lea.vmem [#allocation3], 2
    %338 = vst.msk [vmem:[%s337] sm:$0x3] %vm232, %v335
    %s339 = scalar_lea.vmem [#allocation2], 4
    %v340 = vld [vmem:[%s339] sm:$0x3]
    %v341 = vsel %vm129, %v335, 0
    %343 = vmatprep.subr.mxu0 0.0
    %344 = vmatpush1.msra.mxu0 0.0
    %345 = vmatprep.subr.mxu0 0.0
    %346 = vmatpush1.msra.mxu0 0.0
    %347 = vmatprep.subr.mxu0 0.0
    %348 = vmatpush1.msra.mxu0 0.0
    %349 = vmatprep.subr.mxu0 0.0
    %350 = vmatpush1.msra.mxu0 0.0
    %351 = vmatprep.subr.mxu0 0.0
    %352 = vmatpush1.msra.mxu0 0.0
    %353 = vmatprep.subr.mxu0 0.0
    %354 = vmatpush1.msra.mxu0 0.0
    %355 = vmatprep.subr.mxu0 0.0
    %356 = vmatpush1.msra.mxu0 0.0
    %357 = vmatprep.subr.mxu0 0.0
    %358 = vmatpush1.msra.mxu0 0.0
    %359 = vmatprep.subr.mxu0 0.0
    %360 = vmatpush1.msra.mxu0 0.0
    %361 = vmatprep.subr.mxu0 0.0
    %362 = vmatpush1.msra.mxu0 0.0
    %363 = vmatprep.subr.mxu0 0.0
    %364 = vmatpush1.msra.mxu0 0.0
    %365 = vmatprep.subr.mxu0 0.0
    %366 = vmatpush1.msra.mxu0 0.0
    %367 = vmatprep.subr.mxu0 0.0
    %368 = vmatpush1.msra.mxu0 %v127
    %369 = vmatprep.subr.mxu0 0.0
    %370 = vmatpush1.msra.mxu0 %v126
    %371 = vmatprep.subr.mxu0 0.0
    %372 = vmatpush1.msra.mxu0 %v125
    %373 = vmatprep.subr.mxu0 0.0
    %374 = vmatpush1.msra.mxu0 %v124
    %375 = vmatprep.subr.mxu0 0.0
    %376 = vmatpush2.msra.mxu0 0.0
    %377 = vmatprep.subr.mxu0 0.0
    %378 = vmatpush2.msra.mxu0 0.0
    %379 = vmatprep.subr.mxu0 0.0
    %380 = vmatpush2.msra.mxu0 0.0
    %381 = vmatprep.subr.mxu0 0.0
    %382 = vmatpush2.msra.mxu0 0.0
    %383 = vmatprep.subr.mxu0 0.0
    %384 = vmatpush2.msra.mxu0 0.0
    %385 = vmatprep.subr.mxu0 0.0
    %386 = vmatpush2.msra.mxu0 0.0
    %387 = vmatprep.subr.mxu0 0.0
    %388 = vmatpush2.msra.mxu0 0.0
    %389 = vmatprep.subr.mxu0 0.0
    %390 = vmatpush2.msra.mxu0 0.0
    %391 = vmatprep.subr.mxu0 0.0
    %392 = vmatpush2.msra.mxu0 0.0
    %393 = vmatprep.subr.mxu0 0.0
    %394 = vmatpush2.msra.mxu0 0.0
    %395 = vmatprep.subr.mxu0 0.0
    %396 = vmatpush2.msra.mxu0 0.0
    %397 = vmatprep.subr.mxu0 0.0
    %398 = vmatpush2.msra.mxu0 0.0
    %399 = vmatprep.subr.mxu0 0.0
    %400 = vmatpush2.msra.mxu0 0.0
    %401 = vmatprep.subr.mxu0 0.0
    %402 = vmatpush2.msra.mxu0 0.0
    %403 = vmatprep.subr.mxu0 0.0
    %404 = vmatpush2.msra.mxu0 0.0
    %405 = vmatprep.subr.mxu0 0.0
    %406 = vmatpush2.msra.mxu0 0.0
    %407 = vmatprep.mubr.f32.mxu0 0.0
    %408 = vmatmul.mubr.f32.gmra.mxu0 %v341
    %v409 = vpop.f32.mrf.mxu0
    %v410 = vadd.f32 0.0, %v409
    %v411 = vpop.f32.mrf.mxu0
    %412 = vdwg.mxu0
    %v413 = vadd.f32 %v340, %v410
    %v414 = vxor.u32 %v413, 2147483648
    %v415 = vmul.f32 %v414, 1.442695
    %v416 = vpow.pop %v415
    %v417 = vadd.f32 %v416, 1.0
    %v418 = vrcp.pop %v417
    %v419 = vmul.f32 1.0, %v418
    %v420 = vtanh.pop %v413
    %v421 = vmul.f32 %v419, %v326
    %423 = vrot.lane.b32.xlu0 %v420, 32
    %v424 = vpop.permute.xlu0 %423
    %v426 = vmul.f32 %v419, %v424
    %428 = vrot.lane.b32.xlu0 %v426, 32
    %v429 = vpop.permute.xlu0 %428
    %v431 = vadd.f32 %v421, %v429
    %v432 = vtanh.pop %v431
    %434 = vrot.lane.b32.xlu0 %v432, 32
    %v435 = vpop.permute.xlu0 %434
    %v437 = vmul.f32 %v419, %v435
    %439 = vrot.lane.b32.xlu0 %v437, 64
    %v440 = vpop.permute.xlu0 %439
    %s442 = scalar_lea.vmem [#allocation3], 4
    %443 = vst.msk [vmem:[%s442] sm:$0x3] %vm232, %v440
    %s444 = scalar_lea.vmem [#allocation2], 6
    %v445 = vld [vmem:[%s444] sm:$0x3]
    %v446 = vsel %vm129, %v440, 0
    %448 = vmatprep.subr.mxu0 0.0
    %449 = vmatpush1.msra.mxu0 0.0
    %450 = vmatprep.subr.mxu0 0.0
    %451 = vmatpush1.msra.mxu0 0.0
    %452 = vmatprep.subr.mxu0 0.0
    %453 = vmatpush1.msra.mxu0 0.0
    %454 = vmatprep.subr.mxu0 0.0
    %455 = vmatpush1.msra.mxu0 0.0
    %456 = vmatprep.subr.mxu0 0.0
    %457 = vmatpush1.msra.mxu0 0.0
    %458 = vmatprep.subr.mxu0 0.0
    %459 = vmatpush1.msra.mxu0 0.0
    %460 = vmatprep.subr.mxu0 0.0
    %461 = vmatpush1.msra.mxu0 0.0
    %462 = vmatprep.subr.mxu0 0.0
    %463 = vmatpush1.msra.mxu0 0.0
    %464 = vmatprep.subr.mxu0 0.0
    %465 = vmatpush1.msra.mxu0 0.0
    %466 = vmatprep.subr.mxu0 0.0
    %467 = vmatpush1.msra.mxu0 0.0
    %468 = vmatprep.subr.mxu0 0.0
    %469 = vmatpush1.msra.mxu0 0.0
    %470 = vmatprep.subr.mxu0 0.0
    %471 = vmatpush1.msra.mxu0 0.0
    %472 = vmatprep.subr.mxu0 0.0
    %473 = vmatpush1.msra.mxu0 %v127
    %474 = vmatprep.subr.mxu0 0.0
    %475 = vmatpush1.msra.mxu0 %v126
    %476 = vmatprep.subr.mxu0 0.0
    %477 = vmatpush1.msra.mxu0 %v125
    %478 = vmatprep.subr.mxu0 0.0
    %479 = vmatpush1.msra.mxu0 %v124
    %480 = vmatprep.subr.mxu0 0.0
    %481 = vmatpush2.msra.mxu0 0.0
    %482 = vmatprep.subr.mxu0 0.0
    %483 = vmatpush2.msra.mxu0 0.0
    %484 = vmatprep.subr.mxu0 0.0
    %485 = vmatpush2.msra.mxu0 0.0
    %486 = vmatprep.subr.mxu0 0.0
    %487 = vmatpush2.msra.mxu0 0.0
    %488 = vmatprep.subr.mxu0 0.0
    %489 = vmatpush2.msra.mxu0 0.0
    %490 = vmatprep.subr.mxu0 0.0
    %491 = vmatpush2.msra.mxu0 0.0
    %492 = vmatprep.subr.mxu0 0.0
    %493 = vmatpush2.msra.mxu0 0.0
    %494 = vmatprep.subr.mxu0 0.0
    %495 = vmatpush2.msra.mxu0 0.0
    %496 = vmatprep.subr.mxu0 0.0
    %497 = vmatpush2.msra.mxu0 0.0
    %498 = vmatprep.subr.mxu0 0.0
    %499 = vmatpush2.msra.mxu0 0.0
    %500 = vmatprep.subr.mxu0 0.0
    %501 = vmatpush2.msra.mxu0 0.0
    %502 = vmatprep.subr.mxu0 0.0
    %503 = vmatpush2.msra.mxu0 0.0
    %504 = vmatprep.subr.mxu0 0.0
    %505 = vmatpush2.msra.mxu0 0.0
    %506 = vmatprep.subr.mxu0 0.0
    %507 = vmatpush2.msra.mxu0 0.0
    %508 = vmatprep.subr.mxu0 0.0
    %509 = vmatpush2.msra.mxu0 0.0
    %510 = vmatprep.subr.mxu0 0.0
    %511 = vmatpush2.msra.mxu0 0.0
    %512 = vmatprep.mubr.f32.mxu0 0.0
    %513 = vmatmul.mubr.f32.gmra.mxu0 %v446
    %v514 = vpop.f32.mrf.mxu0
    %v515 = vadd.f32 0.0, %v514
    %v516 = vpop.f32.mrf.mxu0
    %517 = vdwg.mxu0
    %v518 = vadd.f32 %v445, %v515
    %v519 = vxor.u32 %v518, 2147483648
    %v520 = vmul.f32 %v519, 1.442695
    %v521 = vpow.pop %v520
    %v522 = vadd.f32 %v521, 1.0
    %v523 = vrcp.pop %v522
    %v524 = vmul.f32 1.0, %v523
    %v525 = vtanh.pop %v518
    %v526 = vmul.f32 %v524, %v431
    %528 = vrot.lane.b32.xlu0 %v525, 32
    %v529 = vpop.permute.xlu0 %528
    %v531 = vmul.f32 %v524, %v529
    %533 = vrot.lane.b32.xlu0 %v531, 32
    %v534 = vpop.permute.xlu0 %533
    %v536 = vadd.f32 %v526, %v534
    %v537 = vtanh.pop %v536
    %539 = vrot.lane.b32.xlu0 %v537, 32
    %v540 = vpop.permute.xlu0 %539
    %v542 = vmul.f32 %v524, %v540
    %544 = vrot.lane.b32.xlu0 %v542, 64
    %v545 = vpop.permute.xlu0 %544
    %s547 = scalar_lea.vmem [#allocation3], 6
    %548 = vst.msk [vmem:[%s547] sm:$0x3] %vm232, %v545
    %s549 = scalar_lea.vmem [#allocation2], 8
    %v550 = vld [vmem:[%s549] sm:$0x3]
    %v551 = vsel %vm129, %v545, 0
    %553 = vmatprep.subr.mxu0 0.0
    %554 = vmatpush1.msra.mxu0 0.0
    %555 = vmatprep.subr.mxu0 0.0
    %556 = vmatpush1.msra.mxu0 0.0
    %557 = vmatprep.subr.mxu0 0.0
    %558 = vmatpush1.msra.mxu0 0.0
    %559 = vmatprep.subr.mxu0 0.0
    %560 = vmatpush1.msra.mxu0 0.0
    %561 = vmatprep.subr.mxu0 0.0
    %562 = vmatpush1.msra.mxu0 0.0
    %563 = vmatprep.subr.mxu0 0.0
    %564 = vmatpush1.msra.mxu0 0.0
    %565 = vmatprep.subr.mxu0 0.0
    %566 = vmatpush1.msra.mxu0 0.0
    %567 = vmatprep.subr.mxu0 0.0
    %568 = vmatpush1.msra.mxu0 0.0
    %569 = vmatprep.subr.mxu0 0.0
    %570 = vmatpush1.msra.mxu0 0.0
    %571 = vmatprep.subr.mxu0 0.0
    %572 = vmatpush1.msra.mxu0 0.0
    %573 = vmatprep.subr.mxu0 0.0
    %574 = vmatpush1.msra.mxu0 0.0
    %575 = vmatprep.subr.mxu0 0.0
    %576 = vmatpush1.msra.mxu0 0.0
    %577 = vmatprep.subr.mxu0 0.0
    %578 = vmatpush1.msra.mxu0 %v127
    %579 = vmatprep.subr.mxu0 0.0
    %580 = vmatpush1.msra.mxu0 %v126
    %581 = vmatprep.subr.mxu0 0.0
    %582 = vmatpush1.msra.mxu0 %v125
    %583 = vmatprep.subr.mxu0 0.0
    %584 = vmatpush1.msra.mxu0 %v124
    %585 = vmatprep.subr.mxu0 0.0
    %586 = vmatpush2.msra.mxu0 0.0
    %587 = vmatprep.subr.mxu0 0.0
    %588 = vmatpush2.msra.mxu0 0.0
    %589 = vmatprep.subr.mxu0 0.0
    %590 = vmatpush2.msra.mxu0 0.0
    %591 = vmatprep.subr.mxu0 0.0
    %592 = vmatpush2.msra.mxu0 0.0
    %593 = vmatprep.subr.mxu0 0.0
    %594 = vmatpush2.msra.mxu0 0.0
    %595 = vmatprep.subr.mxu0 0.0
    %596 = vmatpush2.msra.mxu0 0.0
    %597 = vmatprep.subr.mxu0 0.0
    %598 = vmatpush2.msra.mxu0 0.0
    %599 = vmatprep.subr.mxu0 0.0
    %600 = vmatpush2.msra.mxu0 0.0
    %601 = vmatprep.subr.mxu0 0.0
    %602 = vmatpush2.msra.mxu0 0.0
    %603 = vmatprep.subr.mxu0 0.0
    %604 = vmatpush2.msra.mxu0 0.0
    %605 = vmatprep.subr.mxu0 0.0
    %606 = vmatpush2.msra.mxu0 0.0
    %607 = vmatprep.subr.mxu0 0.0
    %608 = vmatpush2.msra.mxu0 0.0
    %609 = vmatprep.subr.mxu0 0.0
    %610 = vmatpush2.msra.mxu0 0.0
    %611 = vmatprep.subr.mxu0 0.0
    %612 = vmatpush2.msra.mxu0 0.0
    %613 = vmatprep.subr.mxu0 0.0
    %614 = vmatpush2.msra.mxu0 0.0
    %615 = vmatprep.subr.mxu0 0.0
    %616 = vmatpush2.msra.mxu0 0.0
    %617 = vmatprep.mubr.f32.mxu0 0.0
    %618 = vmatmul.mubr.f32.gmra.mxu0 %v551
    %v619 = vpop.f32.mrf.mxu0
    %v620 = vadd.f32 0.0, %v619
    %v621 = vpop.f32.mrf.mxu0
    %622 = vdwg.mxu0
    %v623 = vadd.f32 %v550, %v620
    %v624 = vxor.u32 %v623, 2147483648
    %v625 = vmul.f32 %v624, 1.442695
    %v626 = vpow.pop %v625
    %v627 = vadd.f32 %v626, 1.0
    %v628 = vrcp.pop %v627
    %v629 = vmul.f32 1.0, %v628
    %v630 = vtanh.pop %v623
    %v631 = vmul.f32 %v629, %v536
    %633 = vrot.lane.b32.xlu0 %v630, 32
    %v634 = vpop.permute.xlu0 %633
    %v636 = vmul.f32 %v629, %v634
    %638 = vrot.lane.b32.xlu0 %v636, 32
    %v639 = vpop.permute.xlu0 %638
    %v641 = vadd.f32 %v631, %v639
    %v642 = vtanh.pop %v641
    %644 = vrot.lane.b32.xlu0 %v642, 32
    %v645 = vpop.permute.xlu0 %644
    %v647 = vmul.f32 %v629, %v645
    %649 = vrot.lane.b32.xlu0 %v647, 64
    %v650 = vpop.permute.xlu0 %649
    %s652 = scalar_lea.vmem [#allocation3], 8
    %653 = vst.msk [vmem:[%s652] sm:$0x3] %vm232, %v650
    %s654 = scalar_lea.vmem [#allocation2], 10
    %v655 = vld [vmem:[%s654] sm:$0x3]
    %v656 = vsel %vm129, %v650, 0
    %658 = vmatprep.subr.mxu0 0.0
    %659 = vmatpush1.msra.mxu0 0.0
    %660 = vmatprep.subr.mxu0 0.0
    %661 = vmatpush1.msra.mxu0 0.0
    %662 = vmatprep.subr.mxu0 0.0
    %663 = vmatpush1.msra.mxu0 0.0
    %664 = vmatprep.subr.mxu0 0.0
    %665 = vmatpush1.msra.mxu0 0.0
    %666 = vmatprep.subr.mxu0 0.0
    %667 = vmatpush1.msra.mxu0 0.0
    %668 = vmatprep.subr.mxu0 0.0
    %669 = vmatpush1.msra.mxu0 0.0
    %670 = vmatprep.subr.mxu0 0.0
    %671 = vmatpush1.msra.mxu0 0.0
    %672 = vmatprep.subr.mxu0 0.0
    %673 = vmatpush1.msra.mxu0 0.0
    %674 = vmatprep.subr.mxu0 0.0
    %675 = vmatpush1.msra.mxu0 0.0
    %676 = vmatprep.subr.mxu0 0.0
    %677 = vmatpush1.msra.mxu0 0.0
    %678 = vmatprep.subr.mxu0 0.0
    %679 = vmatpush1.msra.mxu0 0.0
    %680 = vmatprep.subr.mxu0 0.0
    %681 = vmatpush1.msra.mxu0 0.0
    %682 = vmatprep.subr.mxu0 0.0
    %683 = vmatpush1.msra.mxu0 %v127
    %684 = vmatprep.subr.mxu0 0.0
    %685 = vmatpush1.msra.mxu0 %v126
    %686 = vmatprep.subr.mxu0 0.0
    %687 = vmatpush1.msra.mxu0 %v125
    %688 = vmatprep.subr.mxu0 0.0
    %689 = vmatpush1.msra.mxu0 %v124
    %690 = vmatprep.subr.mxu0 0.0
    %691 = vmatpush2.msra.mxu0 0.0
    %692 = vmatprep.subr.mxu0 0.0
    %693 = vmatpush2.msra.mxu0 0.0
    %694 = vmatprep.subr.mxu0 0.0
    %695 = vmatpush2.msra.mxu0 0.0
    %696 = vmatprep.subr.mxu0 0.0
    %697 = vmatpush2.msra.mxu0 0.0
    %698 = vmatprep.subr.mxu0 0.0
    %699 = vmatpush2.msra.mxu0 0.0
    %700 = vmatprep.subr.mxu0 0.0
    %701 = vmatpush2.msra.mxu0 0.0
    %702 = vmatprep.subr.mxu0 0.0
    %703 = vmatpush2.msra.mxu0 0.0
    %704 = vmatprep.subr.mxu0 0.0
    %705 = vmatpush2.msra.mxu0 0.0
    %706 = vmatprep.subr.mxu0 0.0
    %707 = vmatpush2.msra.mxu0 0.0
    %708 = vmatprep.subr.mxu0 0.0
    %709 = vmatpush2.msra.mxu0 0.0
    %710 = vmatprep.subr.mxu0 0.0
    %711 = vmatpush2.msra.mxu0 0.0
    %712 = vmatprep.subr.mxu0 0.0
    %713 = vmatpush2.msra.mxu0 0.0
    %714 = vmatprep.subr.mxu0 0.0
    %715 = vmatpush2.msra.mxu0 0.0
    %716 = vmatprep.subr.mxu0 0.0
    %717 = vmatpush2.msra.mxu0 0.0
    %718 = vmatprep.subr.mxu0 0.0
    %719 = vmatpush2.msra.mxu0 0.0
    %720 = vmatprep.subr.mxu0 0.0
    %721 = vmatpush2.msra.mxu0 0.0
    %722 = vmatprep.mubr.f32.mxu0 0.0
    %723 = vmatmul.mubr.f32.gmra.mxu0 %v656
    %v724 = vpop.f32.mrf.mxu0
    %v725 = vadd.f32 0.0, %v724
    %v726 = vpop.f32.mrf.mxu0
    %727 = vdwg.mxu0
    %v728 = vadd.f32 %v655, %v725
    %v729 = vxor.u32 %v728, 2147483648
    %v730 = vmul.f32 %v729, 1.442695
    %v731 = vpow.pop %v730
    %v732 = vadd.f32 %v731, 1.0
    %v733 = vrcp.pop %v732
    %v734 = vmul.f32 1.0, %v733
    %v735 = vtanh.pop %v728
    %v736 = vmul.f32 %v734, %v641
    %738 = vrot.lane.b32.xlu0 %v735, 32
    %v739 = vpop.permute.xlu0 %738
    %v741 = vmul.f32 %v734, %v739
    %743 = vrot.lane.b32.xlu0 %v741, 32
    %v744 = vpop.permute.xlu0 %743
    %v746 = vadd.f32 %v736, %v744
    %v747 = vtanh.pop %v746
    %749 = vrot.lane.b32.xlu0 %v747, 32
    %v750 = vpop.permute.xlu0 %749
    %v752 = vmul.f32 %v734, %v750
    %754 = vrot.lane.b32.xlu0 %v752, 64
    %v755 = vpop.permute.xlu0 %754
    %s757 = scalar_lea.vmem [#allocation3], 10
    %758 = vst.msk [vmem:[%s757] sm:$0x3] %vm232, %v755
    %s759 = scalar_lea.vmem [#allocation2], 12
    %v760 = vld [vmem:[%s759] sm:$0x3]
    %v761 = vsel %vm129, %v755, 0
    %763 = vmatprep.subr.mxu0 0.0
    %764 = vmatpush1.msra.mxu0 0.0
    %765 = vmatprep.subr.mxu0 0.0
    %766 = vmatpush1.msra.mxu0 0.0
    %767 = vmatprep.subr.mxu0 0.0
    %768 = vmatpush1.msra.mxu0 0.0
    %769 = vmatprep.subr.mxu0 0.0
    %770 = vmatpush1.msra.mxu0 0.0
    %771 = vmatprep.subr.mxu0 0.0
    %772 = vmatpush1.msra.mxu0 0.0
    %773 = vmatprep.subr.mxu0 0.0
    %774 = vmatpush1.msra.mxu0 0.0
    %775 = vmatprep.subr.mxu0 0.0
    %776 = vmatpush1.msra.mxu0 0.0
    %777 = vmatprep.subr.mxu0 0.0
    %778 = vmatpush1.msra.mxu0 0.0
    %779 = vmatprep.subr.mxu0 0.0
    %780 = vmatpush1.msra.mxu0 0.0
    %781 = vmatprep.subr.mxu0 0.0
    %782 = vmatpush1.msra.mxu0 0.0
    %783 = vmatprep.subr.mxu0 0.0
    %784 = vmatpush1.msra.mxu0 0.0
    %785 = vmatprep.subr.mxu0 0.0
    %786 = vmatpush1.msra.mxu0 0.0
    %787 = vmatprep.subr.mxu0 0.0
    %788 = vmatpush1.msra.mxu0 %v127
    %789 = vmatprep.subr.mxu0 0.0
    %790 = vmatpush1.msra.mxu0 %v126
    %791 = vmatprep.subr.mxu0 0.0
    %792 = vmatpush1.msra.mxu0 %v125
    %793 = vmatprep.subr.mxu0 0.0
    %794 = vmatpush1.msra.mxu0 %v124
    %795 = vmatprep.subr.mxu0 0.0
    %796 = vmatpush2.msra.mxu0 0.0
    %797 = vmatprep.subr.mxu0 0.0
    %798 = vmatpush2.msra.mxu0 0.0
    %799 = vmatprep.subr.mxu0 0.0
    %800 = vmatpush2.msra.mxu0 0.0
    %801 = vmatprep.subr.mxu0 0.0
    %802 = vmatpush2.msra.mxu0 0.0
    %803 = vmatprep.subr.mxu0 0.0
    %804 = vmatpush2.msra.mxu0 0.0
    %805 = vmatprep.subr.mxu0 0.0
    %806 = vmatpush2.msra.mxu0 0.0
    %807 = vmatprep.subr.mxu0 0.0
    %808 = vmatpush2.msra.mxu0 0.0
    %809 = vmatprep.subr.mxu0 0.0
    %810 = vmatpush2.msra.mxu0 0.0
    %811 = vmatprep.subr.mxu0 0.0
    %812 = vmatpush2.msra.mxu0 0.0
    %813 = vmatprep.subr.mxu0 0.0
    %814 = vmatpush2.msra.mxu0 0.0
    %815 = vmatprep.subr.mxu0 0.0
    %816 = vmatpush2.msra.mxu0 0.0
    %817 = vmatprep.subr.mxu0 0.0
    %818 = vmatpush2.msra.mxu0 0.0
    %819 = vmatprep.subr.mxu0 0.0
    %820 = vmatpush2.msra.mxu0 0.0
    %821 = vmatprep.subr.mxu0 0.0
    %822 = vmatpush2.msra.mxu0 0.0
    %823 = vmatprep.subr.mxu0 0.0
    %824 = vmatpush2.msra.mxu0 0.0
    %825 = vmatprep.subr.mxu0 0.0
    %826 = vmatpush2.msra.mxu0 0.0
    %827 = vmatprep.mubr.f32.mxu0 0.0
    %828 = vmatmul.mubr.f32.gmra.mxu0 %v761
    %v829 = vpop.f32.mrf.mxu0
    %v830 = vadd.f32 0.0, %v829
    %v831 = vpop.f32.mrf.mxu0
    %832 = vdwg.mxu0
    %v833 = vadd.f32 %v760, %v830
    %v834 = vxor.u32 %v833, 2147483648
    %v835 = vmul.f32 %v834, 1.442695
    %v836 = vpow.pop %v835
    %v837 = vadd.f32 %v836, 1.0
    %v838 = vrcp.pop %v837
    %v839 = vmul.f32 1.0, %v838
    %v840 = vtanh.pop %v833
    %v841 = vmul.f32 %v839, %v746
    %843 = vrot.lane.b32.xlu0 %v840, 32
    %v844 = vpop.permute.xlu0 %843
    %v846 = vmul.f32 %v839, %v844
    %848 = vrot.lane.b32.xlu0 %v846, 32
    %v849 = vpop.permute.xlu0 %848
    %v851 = vadd.f32 %v841, %v849
    %v852 = vtanh.pop %v851
    %854 = vrot.lane.b32.xlu0 %v852, 32
    %v855 = vpop.permute.xlu0 %854
    %v857 = vmul.f32 %v839, %v855
    %859 = vrot.lane.b32.xlu0 %v857, 64
    %v860 = vpop.permute.xlu0 %859
    %s862 = scalar_lea.vmem [#allocation3], 12
    %863 = vst.msk [vmem:[%s862] sm:$0x3] %vm232, %v860
    %s864 = scalar_lea.vmem [#allocation2], 14
    %v865 = vld [vmem:[%s864] sm:$0x3]
    %v866 = vsel %vm129, %v860, 0
    %868 = vmatprep.subr.mxu0 0.0
    %869 = vmatpush1.msra.mxu0 0.0
    %870 = vmatprep.subr.mxu0 0.0
    %871 = vmatpush1.msra.mxu0 0.0
    %872 = vmatprep.subr.mxu0 0.0
    %873 = vmatpush1.msra.mxu0 0.0
    %874 = vmatprep.subr.mxu0 0.0
    %875 = vmatpush1.msra.mxu0 0.0
    %876 = vmatprep.subr.mxu0 0.0
    %877 = vmatpush1.msra.mxu0 0.0
    %878 = vmatprep.subr.mxu0 0.0
    %879 = vmatpush1.msra.mxu0 0.0
    %880 = vmatprep.subr.mxu0 0.0
    %881 = vmatpush1.msra.mxu0 0.0
    %882 = vmatprep.subr.mxu0 0.0
    %883 = vmatpush1.msra.mxu0 0.0
    %884 = vmatprep.subr.mxu0 0.0
    %885 = vmatpush1.msra.mxu0 0.0
    %886 = vmatprep.subr.mxu0 0.0
    %887 = vmatpush1.msra.mxu0 0.0
    %888 = vmatprep.subr.mxu0 0.0
    %889 = vmatpush1.msra.mxu0 0.0
    %890 = vmatprep.subr.mxu0 0.0
    %891 = vmatpush1.msra.mxu0 0.0
    %892 = vmatprep.subr.mxu0 0.0
    %893 = vmatpush1.msra.mxu0 %v127
    %894 = vmatprep.subr.mxu0 0.0
    %895 = vmatpush1.msra.mxu0 %v126
    %896 = vmatprep.subr.mxu0 0.0
    %897 = vmatpush1.msra.mxu0 %v125
    %898 = vmatprep.subr.mxu0 0.0
    %899 = vmatpush1.msra.mxu0 %v124
    %900 = vmatprep.subr.mxu0 0.0
    %901 = vmatpush2.msra.mxu0 0.0
    %902 = vmatprep.subr.mxu0 0.0
    %903 = vmatpush2.msra.mxu0 0.0
    %904 = vmatprep.subr.mxu0 0.0
    %905 = vmatpush2.msra.mxu0 0.0
    %906 = vmatprep.subr.mxu0 0.0
    %907 = vmatpush2.msra.mxu0 0.0
    %908 = vmatprep.subr.mxu0 0.0
    %909 = vmatpush2.msra.mxu0 0.0
    %910 = vmatprep.subr.mxu0 0.0
    %911 = vmatpush2.msra.mxu0 0.0
    %912 = vmatprep.subr.mxu0 0.0
    %913 = vmatpush2.msra.mxu0 0.0
    %914 = vmatprep.subr.mxu0 0.0
    %915 = vmatpush2.msra.mxu0 0.0
    %916 = vmatprep.subr.mxu0 0.0
    %917 = vmatpush2.msra.mxu0 0.0
    %918 = vmatprep.subr.mxu0 0.0
    %919 = vmatpush2.msra.mxu0 0.0
    %920 = vmatprep.subr.mxu0 0.0
    %921 = vmatpush2.msra.mxu0 0.0
    %922 = vmatprep.subr.mxu0 0.0
    %923 = vmatpush2.msra.mxu0 0.0
    %924 = vmatprep.subr.mxu0 0.0
    %925 = vmatpush2.msra.mxu0 0.0
    %926 = vmatprep.subr.mxu0 0.0
    %927 = vmatpush2.msra.mxu0 0.0
    %928 = vmatprep.subr.mxu0 0.0
    %929 = vmatpush2.msra.mxu0 0.0
    %930 = vmatprep.subr.mxu0 0.0
    %931 = vmatpush2.msra.mxu0 0.0
    %932 = vmatprep.mubr.f32.mxu0 0.0
    %933 = vmatmul.mubr.f32.gmra.mxu0 %v866
    %v934 = vpop.f32.mrf.mxu0
    %v935 = vadd.f32 0.0, %v934
    %v936 = vpop.f32.mrf.mxu0
    %937 = vdwg.mxu0
    %v938 = vadd.f32 %v865, %v935
    %v939 = vxor.u32 %v938, 2147483648
    %v940 = vmul.f32 %v939, 1.442695
    %v941 = vpow.pop %v940
    %v942 = vadd.f32 %v941, 1.0
    %v943 = vrcp.pop %v942
    %v944 = vmul.f32 1.0, %v943
    %v945 = vtanh.pop %v938
    %v946 = vmul.f32 %v944, %v851
    %948 = vrot.lane.b32.xlu0 %v945, 32
    %v949 = vpop.permute.xlu0 %948
    %v951 = vmul.f32 %v944, %v949
    %953 = vrot.lane.b32.xlu0 %v951, 32
    %v954 = vpop.permute.xlu0 %953
    %v956 = vadd.f32 %v946, %v954
    %v957 = vtanh.pop %v956
    %959 = vrot.lane.b32.xlu0 %v957, 32
    %v960 = vpop.permute.xlu0 %959
    %v962 = vmul.f32 %v944, %v960
    %964 = vrot.lane.b32.xlu0 %v962, 64
    %v965 = vpop.permute.xlu0 %964
    %s967 = scalar_lea.vmem [#allocation3], 14
    %968 = vst.msk [vmem:[%s967] sm:$0x3] %vm232, %v965
    %v969 = vld [vmem:[%s4] sm:$0x1]
    %v970 = vld [vmem:[#allocation3] sm:$0x3]
    %v971 = vld [vmem:[#allocation3 + $0x2] sm:$0x3]
    %v972 = vld [vmem:[#allocation3 + $0x4] sm:$0x3]
    %v973 = vld [vmem:[#allocation3 + $0x6] sm:$0x3]
    %v974 = vld [vmem:[#allocation3 + $0x8] sm:$0x3]
    %v975 = vld [vmem:[#allocation3 + $0xa] sm:$0x3]
    %v976 = vld [vmem:[#allocation3 + $0xc] sm:$0x3]
    %v977 = vld [vmem:[#allocation3 + $0xe] sm:$0x3]
    %v979 = vlaneseq
    %v980 = vshrl.u32 %v979, 7
    %v981 = vsub.s32 0, %v980
    %v982 = vrot.slane %v969, %v981
    %v984 = vmul.f32 %v970, %v982
    %v985 = vmul.f32 %v971, %v982
    %v986 = vmul.f32 %v972, %v982
    %v987 = vmul.f32 %v973, %v982
    %v988 = vmul.f32 %v974, %v982
    %v989 = vmul.f32 %v975, %v982
    %v990 = vmul.f32 %v976, %v982
    %v991 = vmul.f32 %v977, %v982
    %v992 = vsel %vm232, %v984, 0.0
    %993 = vadd.xlane.f32.xlu0 %v992
    %v994 = vpop.xlane.xlu0 %993
    %v995 = vsel %vm232, %v985, 0.0
    %996 = vadd.xlane.f32.xlu0 %v995
    %v997 = vpop.xlane.xlu0 %996
    %v998 = vsel %vm232, %v986, 0.0
    %999 = vadd.xlane.f32.xlu0 %v998
    %v1000 = vpop.xlane.xlu0 %999
    %v1001 = vsel %vm232, %v987, 0.0
    %1002 = vadd.xlane.f32.xlu0 %v1001
    %v1003 = vpop.xlane.xlu0 %1002
    %v1004 = vsel %vm232, %v988, 0.0
    %1005 = vadd.xlane.f32.xlu0 %v1004
    %v1006 = vpop.xlane.xlu0 %1005
    %v1007 = vsel %vm232, %v989, 0.0
    %1008 = vadd.xlane.f32.xlu0 %v1007
    %v1009 = vpop.xlane.xlu0 %1008
    %v1010 = vsel %vm232, %v990, 0.0
    %1011 = vadd.xlane.f32.xlu0 %v1010
    %v1012 = vpop.xlane.xlu0 %1011
    %v1013 = vsel %vm232, %v991, 0.0
    %1014 = vadd.xlane.f32.xlu0 %v1013
    %v1015 = vpop.xlane.xlu0 %1014
    %s1016 = sld [smem:[#allocation4]]
    %v1017 = vstv %s1016
    %v1018 = vadd.f32 %v994, %v1017
    %v1019 = vadd.f32 %v997, %v1017
    %v1020 = vadd.f32 %v1000, %v1017
    %v1021 = vadd.f32 %v1003, %v1017
    %v1022 = vadd.f32 %v1006, %v1017
    %v1023 = vadd.f32 %v1009, %v1017
    %v1024 = vadd.f32 %v1012, %v1017
    %v1025 = vadd.f32 %v1015, %v1017
    %v1034 = vlaneseq
    %v1035 = vand.u32 %v1034, 127
    %v1036 = vlaneseq
    %v1037 = vshrl.u32 %v1036, 7
    %v1038 = vsub.s32 %v1035, %v1037
    %v1039 = vrot.slane %v1018, %v1038
    %v1040 = vlaneseq
    %v1041 = vshrl.u32 %v1040, 7
    %v1042 = vsub.s32 %v1035, %v1041
    %v1043 = vrot.slane %v1019, %v1042
    %v1044 = vlaneseq
    %v1045 = vshrl.u32 %v1044, 7
    %v1046 = vsub.s32 %v1035, %v1045
    %v1047 = vrot.slane %v1020, %v1046
    %v1048 = vlaneseq
    %v1049 = vshrl.u32 %v1048, 7
    %v1050 = vsub.s32 %v1035, %v1049
    %v1051 = vrot.slane %v1021, %v1050
    %v1052 = vlaneseq
    %v1053 = vshrl.u32 %v1052, 7
    %v1054 = vsub.s32 %v1035, %v1053
    %v1055 = vrot.slane %v1022, %v1054
    %v1056 = vlaneseq
    %v1057 = vshrl.u32 %v1056, 7
    %v1058 = vsub.s32 %v1035, %v1057
    %v1059 = vrot.slane %v1023, %v1058
    %v1060 = vlaneseq
    %v1061 = vshrl.u32 %v1060, 7
    %v1062 = vsub.s32 %v1035, %v1061
    %v1063 = vrot.slane %v1024, %v1062
    %v1064 = vlaneseq
    %v1065 = vshrl.u32 %v1064, 7
    %v1066 = vsub.s32 %v1035, %v1065
    %v1067 = vrot.slane %v1025, %v1066
    %vm1068 = vcmask 1041409
    %v1069 = vsel %vm1068, %v1043, %v1039
    %vm1070 = vcmask 1042434
    %v1071 = vsel %vm1070, %v1047, %v1069
    %vm1072 = vcmask 1043459
    %v1073 = vsel %vm1072, %v1051, %v1071
    %vm1074 = vcmask 1044484
    %v1075 = vsel %vm1074, %v1055, %v1073
    %vm1076 = vcmask 1045509
    %v1077 = vsel %vm1076, %v1059, %v1075
    %vm1078 = vcmask 1046534
    %v1079 = vsel %vm1078, %v1063, %v1077
    %vm1080 = vcmask 1047559
    %v1081 = vsel %vm1080, %v1067, %v1079
    %vm1083 = vcmask 15360
    %1084 = vst.msk [vmem:[%s6] sm:$0xff] %vm1083, %v1081
    // Predicated region
    $region30: #{tpu_custom_call.1} parent=1 // pred_check
      _
    $region31: #{tpu_custom_call.1} parent=1 // pred_check_branch
      %1086 = sbr.rel (0) target = $region33
    $region32: #{tpu_custom_call.1} parent=1 // pred_region
      _
    $region33: #{tpu_custom_call.1} parent=1 // pred_fallthru
      _
    // Predicated region
    $region34: #{tpu_custom_call.1} parent=1 // pred_check
      _
    $region35: #{tpu_custom_call.1} parent=1 // pred_check_branch
      %1088 = sbr.rel (0) target = $region37
    $region36: #{tpu_custom_call.1} parent=1 // pred_region
      _
    $region37: #{tpu_custom_call.1} parent=1 // pred_fallthru
      _
    %1089 = vsyncpa [#allocation6], 1

</llo_original>
